<compile_context>
chip_gen: v6e
topology: v6e:2x2x1
jax: 0.10.0
libtpu: 0.0.40
codegen_flags: <defaults>
</compile_context>

<pallas_src>
import functools

import jax
import jax.numpy as jnp
from jax import lax
from jax.experimental import pallas as pl
from jax.experimental.pallas import tpu as pltpu


# ----------------------------------------------------------------------------- #
# In-kernel cell math
# ----------------------------------------------------------------------------- #
def _gru_cell(x, h_f32, w1_ref, b1_ref, w_rz_ref, w_in_ref, w_hn_ref,
              b_rz_ref, b_in_ref, b_hn_ref):
    """fc1 -> ReLU -> PyTorch-semantics GRUCell.

    Matmuls run in bf16 on the MXU with f32 accumulation; gate math in f32.
    r/z gates use one fused K=2H matmul on [xh | h]; the n gate keeps separate
    i_n / h_n matmuls (b_hn must stay inside the r * (.) term).
    """
    H = w_in_ref.shape[1]
    bf16 = jnp.bfloat16

    z1 = jnp.dot(x.astype(bf16), w1_ref[...],
                 preferred_element_type=jnp.float32) + b1_ref[...]
    xh = jnp.maximum(z1, 0.0).astype(bf16)

    h_bf = h_f32.astype(bf16)
    xh_h = jnp.concatenate([xh, h_bf], axis=-1)                  # (TB, 2H)

    rz = jnp.dot(xh_h, w_rz_ref[...],
                 preferred_element_type=jnp.float32) + b_rz_ref[...]
    rz = jax.nn.sigmoid(rz)
    r, z = rz[:, :H], rz[:, H:]

    i_n = jnp.dot(xh, w_in_ref[...],
                  preferred_element_type=jnp.float32) + b_in_ref[...]
    h_n = jnp.dot(h_bf, w_hn_ref[...],
                  preferred_element_type=jnp.float32) + b_hn_ref[...]
    n = jnp.tanh(i_n + r * h_n)
    return (1.0 - z) * n + z * h_f32


def gru_step_kernel(x_ref, h_ref, w1_ref, b1_ref, w_rz_ref, w_in_ref, w_hn_ref,
                    b_rz_ref, b_in_ref, b_hn_ref, hout_ref):
    h_new = _gru_cell(x_ref[...], h_ref[...].astype(jnp.float32),
                      w1_ref, b1_ref, w_rz_ref, w_in_ref, w_hn_ref,
                      b_rz_ref, b_in_ref, b_hn_ref)
    hout_ref[...] = h_new.astype(hout_ref.dtype)


def gru_scan_kernel(x_ref, h0_ref, w1_ref, b1_ref, w_rz_ref, w_in_ref, w_hn_ref,
                    b_rz_ref, b_in_ref, b_hn_ref, hseq_ref, h_acc):
    # Grid is (batch_tiles, time_blocks). The time axis MUST stay the innermost
    # ("arbitrary") grid axis: the f32 carry lives in the VMEM scratch h_acc and
    # is only re-initialized when a new batch tile starts (time block == 0).
    @pl.when(pl.program_id(1) == 0)
    def _():
        h_acc[...] = h0_ref[...]

    def step(tt, carry):
        h_new = _gru_cell(x_ref[tt], h_acc[...],
                          w1_ref, b1_ref, w_rz_ref, w_in_ref, w_hn_ref,
                          b_rz_ref, b_in_ref, b_hn_ref)
        h_acc[...] = h_new
        hseq_ref[tt] = h_new.astype(hseq_ref.dtype)
        return carry

    lax.fori_loop(0, x_ref.shape[0], step, 0, unroll=True)


# ----------------------------------------------------------------------------- #
# Wrappers
# ----------------------------------------------------------------------------- #
def _round_up(x, m):
    return (x + m - 1) // m * m


def _pick_tb(B, block_b):
    TB = min(block_b, _round_up(B, 16))
    # Keep >=2 batch tiles when the batch is big enough (v7x second TensorCore).
    if B > 32 and _round_up(B, TB) // TB < 2:
        TB = _round_up(-(-B // 2), 16)
    return TB


def _prepare_params(params):
    """bf16 weights, fused r/z weight layout, pre-summed r/z biases (f32)."""
    H = params["w1"].shape[1]
    bf16 = jnp.bfloat16
    w_ih = params["w_ih"]
    w_hh = params["w_hh"]
    b_ih = params["b_ih"].astype(jnp.float32).reshape(1, 3 * H)
    b_hh = params["b_hh"].astype(jnp.float32).reshape(1, 3 * H)
    return {
        "w1": params["w1"].astype(bf16),                                # (IN, H)
        "b1": params["b1"].astype(jnp.float32).reshape(1, H),
        "w_rz": jnp.concatenate([w_ih[:, :2 * H], w_hh[:, :2 * H]],
                                axis=0).astype(bf16),                   # (2H, 2H)
        "w_in": w_ih[:, 2 * H:].astype(bf16),                           # (H, H)
        "w_hn": w_hh[:, 2 * H:].astype(bf16),                           # (H, H)
        "b_rz": b_ih[:, :2 * H] + b_hh[:, :2 * H],                      # (1, 2H)
        "b_in": b_ih[:, 2 * H:],                                        # (1, H)
        "b_hn": b_hh[:, 2 * H:],                                        # (1, H), inside r*(.)
    }


def _weight_specs(IN, H, index_map):
    return [
        pl.BlockSpec((IN, H), index_map),          # w1
        pl.BlockSpec((1, H), index_map),           # b1
        pl.BlockSpec((2 * H, 2 * H), index_map),   # w_rz
        pl.BlockSpec((H, H), index_map),           # w_in
        pl.BlockSpec((H, H), index_map),           # w_hn
        pl.BlockSpec((1, 2 * H), index_map),       # b_rz
        pl.BlockSpec((1, H), index_map),           # b_in
        pl.BlockSpec((1, H), index_map),           # b_hn
    ]


def _weight_args(p):
    return (p["w1"], p["b1"], p["w_rz"], p["w_in"], p["w_hn"],
            p["b_rz"], p["b_in"], p["b_hn"])


def rnn_feature_agent_forward(inputs, hidden_state, params, *,
                              block_b=512, out_dtype=jnp.bfloat16):
    """Single-step forward. Returns (None, h_new), matching RNNFeatureAgent.forward."""
    B, IN = inputs.shape
    H = params["w1"].shape[1]
    TB = _pick_tb(B, block_b)
    B_pad = _round_up(B, TB)

    # Skip the wrapper pad/cast HBM pass when shapes already conform; the bf16
    # cast for the MXU then happens in-kernel.
    if B_pad == B:
        x = inputs
    else:
        x = jnp.zeros((B_pad, IN), jnp.bfloat16).at[:B].set(
            inputs.astype(jnp.bfloat16))

    h = hidden_state.reshape(-1, H)
    if not (B_pad == B and h.dtype == jnp.bfloat16):
        h = jnp.zeros((B_pad, H), jnp.bfloat16).at[:B].set(h.astype(jnp.bfloat16))

    p = _prepare_params(params)
    const = lambda i: (0, 0)

    h_new = pl.pallas_call(
        gru_step_kernel,
        out_shape=jax.ShapeDtypeStruct((B_pad, H), out_dtype),
        grid=(B_pad // TB,),
        in_specs=[pl.BlockSpec((TB, IN), lambda i: (i, 0)),
                  pl.BlockSpec((TB, H), lambda i: (i, 0))]
                 + _weight_specs(IN, H, const),
        out_specs=pl.BlockSpec((TB, H), lambda i: (i, 0)),
        compiler_params=pltpu.CompilerParams(
            dimension_semantics=("parallel",)),
    )(x, h, *_weight_args(p))
    return None, h_new[:B]


def rnn_feature_agent_scan(inputs_seq, hidden_state, params, *,
                           block_b=512, block_t=8, out_dtype=jnp.bfloat16):
    """Step the cell over T timesteps in ONE pallas_call.

    inputs_seq: (T, B, IN). Returns all hidden states (T, B, H); weights stay
    VMEM-resident for the whole sequence, h carried in an f32 VMEM scratch.
    """
    T, B, IN = inputs_seq.shape
    H = params["w1"].shape[1]
    TB = _pick_tb(B, block_b)
    B_pad = _round_up(B, TB)
    TT = min(block_t, T)
    T_pad = _round_up(T, TT)

    if B_pad == B and T_pad == T:
        x = inputs_seq                                 # native dtype, cast in-kernel
    else:
        x = jnp.zeros((T_pad, B_pad, IN), jnp.bfloat16).at[:T, :B].set(
            inputs_seq.astype(jnp.bfloat16))

    h0 = hidden_state.reshape(-1, H).astype(jnp.float32)
    if B_pad != B:
        h0 = jnp.zeros((B_pad, H), jnp.float32).at[:B].set(h0)

    p = _prepare_params(params)
    const = lambda bi, ti: (0, 0)

    hseq = pl.pallas_call(
        gru_scan_kernel,
        out_shape=jax.ShapeDtypeStruct((T_pad, B_pad, H), out_dtype),
        grid=(B_pad // TB, T_pad // TT),
        in_specs=[pl.BlockSpec((TT, TB, IN), lambda bi, ti: (ti, bi, 0)),
                  pl.BlockSpec((TB, H), lambda bi, ti: (bi, 0))]
                 + _weight_specs(IN, H, const),
        out_specs=pl.BlockSpec((TT, TB, H), lambda bi, ti: (ti, bi, 0)),
        scratch_shapes=[pltpu.VMEM((TB, H), jnp.float32)],      # f32 h carry
        compiler_params=pltpu.CompilerParams(
            dimension_semantics=("parallel", "arbitrary")),
    )(x, h0, *_weight_args(p))
    return hseq[:T, :B, :]


# ----------------------------------------------------------------------------- #
# Params + references
# ----------------------------------------------------------------------------- #
def init_params(key, input_shape, hidden_dim):
    """Synthetic init; shapes match nn.Linear + nn.GRUCell (stored transposed)."""
    ks = jax.random.split(key, 6)
    s1 = 1.0 / jnp.sqrt(jnp.float32(input_shape))
    s2 = 1.0 / jnp.sqrt(jnp.float32(hidden_dim))
    return {
        "w1": jax.random.uniform(ks[0], (input_shape, hidden_dim), jnp.float32, -s1, s1),
        "b1": jax.random.uniform(ks[1], (1, hidden_dim), jnp.float32, -s1, s1),
        "w_ih": jax.random.uniform(ks[2], (hidden_dim, 3 * hidden_dim), jnp.float32, -s2, s2),
        "w_hh": jax.random.uniform(ks[3], (hidden_dim, 3 * hidden_dim), jnp.float32, -s2, s2),
        "b_ih": jax.random.uniform(ks[4], (1, 3 * hidden_dim), jnp.float32, -s2, s2),
        "b_hh": jax.random.uniform(ks[5], (1, 3 * hidden_dim), jnp.float32, -s2, s2),
    }


def reference_step_f32(inputs, hidden, params):
    """Pure f32 PyTorch-GRUCell reference."""
    H = params["w1"].shape[1]
    h = hidden.reshape(-1, H)
    xh = jnp.maximum(inputs @ params["w1"] + params["b1"], 0.0)
    gi = xh @ params["w_ih"] + params["b_ih"]
    gh = h @ params["w_hh"] + params["b_hh"]
    i_r, i_z, i_n = gi[:, :H], gi[:, H:2 * H], gi[:, 2 * H:]
    h_r, h_z, h_n = gh[:, :H], gh[:, H:2 * H], gh[:, 2 * H:]
    r = jax.nn.sigmoid(i_r + h_r)
    z = jax.nn.sigmoid(i_z + h_z)
    n = jnp.tanh(i_n + r * h_n)
    return (1.0 - z) * n + z * h


def reference_step_mirror(inputs, hidden, params, *, h_in_bf16):
    """Reference mirroring the kernel's casting (bf16 matmul inputs, f32 accum/gates)."""
    H = params["w1"].shape[1]
    bf = jnp.bfloat16
    h = hidden.reshape(-1, H).astype(jnp.float32)
    if h_in_bf16:
        h = h.astype(bf).astype(jnp.float32)
    z1 = jnp.dot(inputs.astype(bf), params["w1"].astype(bf),
                 preferred_element_type=jnp.float32) + params["b1"].astype(jnp.float32)
    xh = jnp.maximum(z1, 0.0).astype(bf)
    h_bf = h.astype(bf)
    b_ih = params["b_ih"].astype(jnp.float32)
    b_hh = params["b_hh"].astype(jnp.float32)
    gi = jnp.dot(xh, params["w_ih"].astype(bf), preferred_element_type=jnp.float32) + b_ih
    gh = jnp.dot(h_bf, params["w_hh"].astype(bf), preferred_element_type=jnp.float32) + b_hh
    i_r, i_z, i_n = gi[:, :H], gi[:, H:2 * H], gi[:, 2 * H:]
    h_r, h_z, h_n = gh[:, :H], gh[:, H:2 * H], gh[:, 2 * H:]
    r = jax.nn.sigmoid(i_r + h_r)
    z = jax.nn.sigmoid(i_z + h_z)
    n = jnp.tanh(i_n + r * h_n)
    return (1.0 - z) * n + z * h


def reference_scan_mirror(inputs_seq, hidden, params):
    H = params["w1"].shape[1]

    def step(h, x_t):
        h_new = reference_step_mirror(x_t, h, params, h_in_bf16=False)
        return h_new, h_new

    _, hs = jax.lax.scan(step, hidden.reshape(-1, H).astype(jnp.float32), inputs_seq)
    return hs


# ----------------------------------------------------------------------------- #
# Test
# ----------------------------------------------------------------------------- #
if __name__ == "__main__":
    IN, H = 64, 128           # feature dim (non-128-multiple), rnn_hidden_dim
    key = jax.random.PRNGKey(0)
    k_p, k_in1, k_seq1, k_h1, k_in2, k_seq2, k_h2 = jax.random.split(key, 7)
    params = init_params(k_p, IN, H)

    # ---- scenario 1: small batch (needs batch padding), T a multiple of block_t
    B1, T1 = 8, 8
    x1 = jax.random.normal(k_in1, (B1, IN), jnp.float32)
    xs1 = jax.random.normal(k_seq1, (T1, B1, IN), jnp.float32)
    h1 = jax.random.normal(k_h1, (B1, H), jnp.float32)

    fwd = jax.jit(functools.partial(rnn_feature_agent_forward, params=params))
    _, h_new = fwd(x1, h1)
    h_new = jax.block_until_ready(h_new).astype(jnp.float32)
    assert h_new.shape == (B1, H)
    assert jnp.allclose(h_new, reference_step_mirror(x1, h1, params, h_in_bf16=True),
                        atol=3e-2, rtol=3e-2)                  # same-precision math
    assert jnp.allclose(h_new, reference_step_f32(x1, h1, params),
                        atol=7.5e-2, rtol=7.5e-2)              # vs pure-f32 semantics

    scan = jax.jit(functools.partial(rnn_feature_agent_scan, params=params))
    hseq = jax.block_until_ready(scan(xs1, h1)).astype(jnp.float32)
    assert hseq.shape == (T1, B1, H)
    assert jnp.allclose(hseq, reference_scan_mirror(xs1, h1, params),
                        atol=3e-2, rtol=3e-2)

    # ---- scenario 2: batch already a multiple of 16 (pad-skip / in-kernel cast
    # path) and T not a multiple of block_t (time-padding path)
    B2, T2 = 16, 6
    x2 = jax.random.normal(k_in2, (B2, IN), jnp.float32)
    xs2 = jax.random.normal(k_seq2, (T2, B2, IN), jnp.float32)
    h2 = jax.random.normal(k_h2, (B2, H), jnp.float32)

    _, h_new2 = fwd(x2, h2)
    h_new2 = jax.block_until_ready(h_new2).astype(jnp.float32)
    assert h_new2.shape == (B2, H)
    assert jnp.allclose(h_new2, reference_step_mirror(x2, h2, params, h_in_bf16=True),
                        atol=3e-2, rtol=3e-2)

    scan2 = jax.jit(functools.partial(rnn_feature_agent_scan, params=params, block_t=4))
    hseq2 = jax.block_until_ready(scan2(xs2, h2)).astype(jnp.float32)
    assert hseq2.shape == (T2, B2, H)
    assert jnp.allclose(hseq2, reference_scan_mirror(xs2, h2, params),
                        atol=3e-2, rtol=3e-2)

    print("KERNEL_OK")
</pallas_src>

<mosaic_0001>
module attributes {stable_mosaic.version = 11 : i64} {
  func.func @gru_step_kernel(%arg0: i32, %arg1: memref<16x64xbf16, #tpu.memory_space<vmem>>, %arg2: memref<16x128xbf16, #tpu.memory_space<vmem>>, %arg3: memref<64x128xbf16, #tpu.memory_space<vmem>>, %arg4: memref<1x128xf32, #tpu.memory_space<vmem>>, %arg5: memref<256x256xbf16, #tpu.memory_space<vmem>>, %arg6: memref<128x128xbf16, #tpu.memory_space<vmem>>, %arg7: memref<128x128xbf16, #tpu.memory_space<vmem>>, %arg8: memref<1x256xf32, #tpu.memory_space<vmem>>, %arg9: memref<1x128xf32, #tpu.memory_space<vmem>>, %arg10: memref<1x128xf32, #tpu.memory_space<vmem>>, %arg11: memref<16x128xbf16, #tpu.memory_space<vmem>>) attributes {dimension_semantics = [#tpu.dimension_semantics<parallel>], iteration_bounds = array<i64: 1>, scalar_prefetch = 0 : i64, scratch_operands = 0 : i64, tpu.core_type = #tpu.core_type<tc>, window_params = [{transform_indices = @transform_0, window_bounds = array<i64: 16, 64>}, {transform_indices = @transform_1, window_bounds = array<i64: 16, 128>}, {pipeline_mode = #tpu.pipeline_mode<synchronous>, transform_indices = @transform_2, window_bounds = array<i64: 64, 128>}, {pipeline_mode = #tpu.pipeline_mode<synchronous>, transform_indices = @transform_3, window_bounds = array<i64: 1, 128>}, {pipeline_mode = #tpu.pipeline_mode<synchronous>, transform_indices = @transform_4, window_bounds = array<i64: 256, 256>}, {pipeline_mode = #tpu.pipeline_mode<synchronous>, transform_indices = @transform_5, window_bounds = array<i64: 128, 128>}, {pipeline_mode = #tpu.pipeline_mode<synchronous>, transform_indices = @transform_6, window_bounds = array<i64: 128, 128>}, {pipeline_mode = #tpu.pipeline_mode<synchronous>, transform_indices = @transform_7, window_bounds = array<i64: 1, 256>}, {pipeline_mode = #tpu.pipeline_mode<synchronous>, transform_indices = @transform_8, window_bounds = array<i64: 1, 128>}, {pipeline_mode = #tpu.pipeline_mode<synchronous>, transform_indices = @transform_9, window_bounds = array<i64: 1, 128>}, {transform_indices = @transform_10, window_bounds = array<i64: 16, 128>}]} {
    %c0 = arith.constant 0 : index
    %c0_0 = arith.constant 0 : index
    %0 = vector.load %arg1[%c0, %c0_0] : memref<16x64xbf16, #tpu.memory_space<vmem>>, vector<16x64xbf16>
    %c0_1 = arith.constant 0 : index
    %c0_2 = arith.constant 0 : index
    %1 = vector.load %arg2[%c0_1, %c0_2] : memref<16x128xbf16, #tpu.memory_space<vmem>>, vector<16x128xbf16>
    %2 = arith.extf %1 : vector<16x128xbf16> to vector<16x128xf32>
    %c0_3 = arith.constant 0 : index
    %c0_4 = arith.constant 0 : index
    %3 = vector.load %arg3[%c0_3, %c0_4] : memref<64x128xbf16, #tpu.memory_space<vmem>>, vector<64x128xbf16>
    %cst = arith.constant dense<0.000000e+00> : vector<16x128xf32>
    %4 = tpu.matmul %0, %3, %cst {dimension_numbers = #tpu.dot_dimension_numbers<[1], [0], [0], [1], [0, 0, 1, 1], [], []>} : vector<16x64xbf16>, vector<64x128xbf16>, vector<16x128xf32> -> vector<16x128xf32>
    %c0_5 = arith.constant 0 : index
    %c0_6 = arith.constant 0 : index
    %5 = vector.load %arg4[%c0_5, %c0_6] : memref<1x128xf32, #tpu.memory_space<vmem>>, vector<1x128xf32>
    %6 = vector.broadcast %5 : vector<1x128xf32> to vector<16x128xf32>
    %7 = arith.addf %4, %6 : vector<16x128xf32>
    %cst_7 = arith.constant 0.000000e+00 : f32
    %8 = vector.broadcast %cst_7 : f32 to vector<16x128xf32>
    %9 = arith.maximumf %7, %8 : vector<16x128xf32>
    %10 = arith.truncf %9 : vector<16x128xf32> to vector<16x128xbf16>
    %11 = arith.truncf %2 : vector<16x128xf32> to vector<16x128xbf16>
    %12 = tpu.concatenate %10, %11 in 1 : vector<16x128xbf16>, vector<16x128xbf16> -> vector<16x256xbf16>
    %c0_8 = arith.constant 0 : index
    %c0_9 = arith.constant 0 : index
    %13 = vector.load %arg5[%c0_8, %c0_9] : memref<256x256xbf16, #tpu.memory_space<vmem>>, vector<256x256xbf16>
    %cst_10 = arith.constant dense<0.000000e+00> : vector<16x256xf32>
    %14 = tpu.matmul %12, %13, %cst_10 {dimension_numbers = #tpu.dot_dimension_numbers<[1], [0], [0], [1], [0, 0, 1, 1], [], []>} : vector<16x256xbf16>, vector<256x256xbf16>, vector<16x256xf32> -> vector<16x256xf32>
    %c0_11 = arith.constant 0 : index
    %c0_12 = arith.constant 0 : index
    %15 = vector.load %arg8[%c0_11, %c0_12] : memref<1x256xf32, #tpu.memory_space<vmem>>, vector<1x256xf32>
    %16 = vector.broadcast %15 : vector<1x256xf32> to vector<16x256xf32>
    %17 = arith.addf %14, %16 : vector<16x256xf32>
    %18 = arith.negf %17 : vector<16x256xf32>
    %19 = math.exp %18 : vector<16x256xf32>
    %cst_13 = arith.constant 1.000000e+00 : f32
    %20 = vector.broadcast %cst_13 : f32 to vector<16x256xf32>
    %21 = arith.addf %20, %19 : vector<16x256xf32>
    %22 = arith.divf %20, %21 : vector<16x256xf32>
    %23 = vector.extract_strided_slice %22 {offsets = [0, 0], sizes = [16, 128], strides = [1, 1]} : vector<16x256xf32> to vector<16x128xf32>
    %24 = vector.extract_strided_slice %22 {offsets = [0, 128], sizes = [16, 128], strides = [1, 1]} : vector<16x256xf32> to vector<16x128xf32>
    %c0_14 = arith.constant 0 : index
    %c0_15 = arith.constant 0 : index
    %25 = vector.load %arg6[%c0_14, %c0_15] : memref<128x128xbf16, #tpu.memory_space<vmem>>, vector<128x128xbf16>
    %cst_16 = arith.constant dense<0.000000e+00> : vector<16x128xf32>
    %26 = tpu.matmul %10, %25, %cst_16 {dimension_numbers = #tpu.dot_dimension_numbers<[1], [0], [0], [1], [0, 0, 1, 1], [], []>} : vector<16x128xbf16>, vector<128x128xbf16>, vector<16x128xf32> -> vector<16x128xf32>
    %c0_17 = arith.constant 0 : index
    %c0_18 = arith.constant 0 : index
    %27 = vector.load %arg9[%c0_17, %c0_18] : memref<1x128xf32, #tpu.memory_space<vmem>>, vector<1x128xf32>
    %28 = vector.broadcast %27 : vector<1x128xf32> to vector<16x128xf32>
    %29 = arith.addf %26, %28 : vector<16x128xf32>
    %c0_19 = arith.constant 0 : index
    %c0_20 = arith.constant 0 : index
    %30 = vector.load %arg7[%c0_19, %c0_20] : memref<128x128xbf16, #tpu.memory_space<vmem>>, vector<128x128xbf16>
    %cst_21 = arith.constant dense<0.000000e+00> : vector<16x128xf32>
    %31 = tpu.matmul %11, %30, %cst_21 {dimension_numbers = #tpu.dot_dimension_numbers<[1], [0], [0], [1], [0, 0, 1, 1], [], []>} : vector<16x128xbf16>, vector<128x128xbf16>, vector<16x128xf32> -> vector<16x128xf32>
    %c0_22 = arith.constant 0 : index
    %c0_23 = arith.constant 0 : index
    %32 = vector.load %arg10[%c0_22, %c0_23] : memref<1x128xf32, #tpu.memory_space<vmem>>, vector<1x128xf32>
    %33 = vector.broadcast %32 : vector<1x128xf32> to vector<16x128xf32>
    %34 = arith.addf %31, %33 : vector<16x128xf32>
    %35 = arith.mulf %23, %34 : vector<16x128xf32>
    %36 = arith.addf %29, %35 : vector<16x128xf32>
    %37 = math.tanh %36 : vector<16x128xf32>
    %cst_24 = arith.constant 1.000000e+00 : f32
    %38 = vector.broadcast %cst_24 : f32 to vector<16x128xf32>
    %39 = arith.subf %38, %24 : vector<16x128xf32>
    %40 = arith.mulf %39, %37 : vector<16x128xf32>
    %41 = arith.mulf %24, %2 : vector<16x128xf32>
    %42 = arith.addf %40, %41 : vector<16x128xf32>
    %43 = arith.truncf %42 : vector<16x128xf32> to vector<16x128xbf16>
    %c0_25 = arith.constant 0 : index
    %c0_26 = arith.constant 0 : index
    %44 = vector.load %arg11[%c0_25, %c0_26] : memref<16x128xbf16, #tpu.memory_space<vmem>>, vector<16x128xbf16>
    tpu.vector_store %arg11[%c0_25, %c0_26], %43 {strides = array<i32>} : memref<16x128xbf16, #tpu.memory_space<vmem>>, vector<16x128xbf16>,
    return
  }
  func.func @transform_0(%arg0: i32) -> (i32, i32) {
    %c0_i32 = arith.constant 0 : i32
    %c0_i32_0 = arith.constant 0 : i32
    return %arg0, %c0_i32 : i32, i32
  }
  func.func @transform_1(%arg0: i32) -> (i32, i32) {
    %c0_i32 = arith.constant 0 : i32
    %c0_i32_0 = arith.constant 0 : i32
    return %arg0, %c0_i32 : i32, i32
  }
  func.func @transform_2(%arg0: i32) -> (i32, i32) {
    %c0_i32 = arith.constant 0 : i32
    %c0_i32_0 = arith.constant 0 : i32
    %c0_i32_1 = arith.constant 0 : i32
    return %c0_i32, %c0_i32_0 : i32, i32
  }
  func.func @transform_3(%arg0: i32) -> (i32, i32) {
    %c0_i32 = arith.constant 0 : i32
    %c0_i32_0 = arith.constant 0 : i32
    %c0_i32_1 = arith.constant 0 : i32
    return %c0_i32, %c0_i32_0 : i32, i32
  }
  func.func @transform_4(%arg0: i32) -> (i32, i32) {
    %c0_i32 = arith.constant 0 : i32
    %c0_i32_0 = arith.constant 0 : i32
    %c0_i32_1 = arith.constant 0 : i32
    return %c0_i32, %c0_i32_0 : i32, i32
  }
  func.func @transform_5(%arg0: i32) -> (i32, i32) {
    %c0_i32 = arith.constant 0 : i32
    %c0_i32_0 = arith.constant 0 : i32
    %c0_i32_1 = arith.constant 0 : i32
    return %c0_i32, %c0_i32_0 : i32, i32
  }
  func.func @transform_6(%arg0: i32) -> (i32, i32) {
    %c0_i32 = arith.constant 0 : i32
    %c0_i32_0 = arith.constant 0 : i32
    %c0_i32_1 = arith.constant 0 : i32
    return %c0_i32, %c0_i32_0 : i32, i32
  }
  func.func @transform_7(%arg0: i32) -> (i32, i32) {
    %c0_i32 = arith.constant 0 : i32
    %c0_i32_0 = arith.constant 0 : i32
    %c0_i32_1 = arith.constant 0 : i32
    return %c0_i32, %c0_i32_0 : i32, i32
  }
  func.func @transform_8(%arg0: i32) -> (i32, i32) {
    %c0_i32 = arith.constant 0 : i32
    %c0_i32_0 = arith.constant 0 : i32
    %c0_i32_1 = arith.constant 0 : i32
    return %c0_i32, %c0_i32_0 : i32, i32
  }
  func.func @transform_9(%arg0: i32) -> (i32, i32) {
    %c0_i32 = arith.constant 0 : i32
    %c0_i32_0 = arith.constant 0 : i32
    %c0_i32_1 = arith.constant 0 : i32
    return %c0_i32, %c0_i32_0 : i32, i32
  }
  func.func @transform_10(%arg0: i32) -> (i32, i32) {
    %c0_i32 = arith.constant 0 : i32
    %c0_i32_0 = arith.constant 0 : i32
    return %arg0, %c0_i32 : i32, i32
  }
}

</mosaic_0001>

<llo_original>
// kernel: rnn_feature_agent_forward.1
$region0: #{rnn_feature_agent_forward.1}
  #allocation0 [shape = 'u32[]', space=smem, size = 0x4, offset = 0x4, fixed_abs, tag = 'smem constant byte address 0x4 - core index']
  #allocation1 [shape = 'u32[144,128]{1,0:T(1,128)}', space=vmem, size = 0x12000, scoped, tag = 'internal scratch']
  %s0 = inlined_call_operand.vmem [shape: bf16[16,64], index: 0, kind: input, shape index: {}]
  %s1 = inlined_call_operand.vmem [shape: bf16[16,128], index: 1, kind: input, shape index: {}]
  %s2 = inlined_call_operand.vmem [shape: bf16[64,128], index: 2, kind: input, shape index: {}]
  %s3 = inlined_call_operand.vmem [shape: f32[1,128], index: 3, kind: input, shape index: {}]
  %s4 = inlined_call_operand.hbm [shape: bf16[256,256], index: 4, kind: input, shape index: {}]
  %s5 = inlined_call_operand.hbm [shape: bf16[128,128], index: 5, kind: input, shape index: {}]
  %s6 = inlined_call_operand.hbm [shape: bf16[128,128], index: 6, kind: input, shape index: {}]
  %s7 = inlined_call_operand.vmem [shape: f32[1,256], index: 7, kind: input, shape index: {}]
  %s8 = inlined_call_operand.vmem [shape: f32[1,128], index: 8, kind: input, shape index: {}]
  %s9 = inlined_call_operand.vmem [shape: f32[1,128], index: 9, kind: input, shape index: {}]
  %s10 = inlined_call_operand.vmem [shape: bf16[16,128], index: 10, kind: output, shape index: {}]
  %s11 = sld [smem:[#allocation0]]
  $region62: #{rnn_feature_agent_forward.1} parent=0
    _
  %s13 = ssub.s32 1, %s11
  %s14 = scalar_select 0, %s13, %s11
  $region1: #{rnn_feature_agent_forward.1} parent=0
    #allocation2 [shape = 'u8[131072]{0}', space=vmem, size = 0x20000, scoped, tag = 'input window, operand 4, single buffered']
    #allocation3 [shape = 's32[1]{0}', space=sflag, size = 0x4, scoped, tag = 'scoped memory for rnn_feature_agent_forward.1']
    #allocation4 [shape = 'u8[32768]{0}', space=vmem, size = 0x8000, scoped, tag = 'input window, operand 5, single buffered']
    #allocation5 [shape = 's32[1]{0}', space=sflag, size = 0x4, scoped, tag = 'scoped memory for rnn_feature_agent_forward.1']
    #allocation6 [shape = 'u8[32768]{0}', space=vmem, size = 0x8000, scoped, tag = 'input window, operand 6, single buffered']
    %15 = vsyncpa [#allocation3], 0
    %16 = vsyncpa [#allocation5], 0
    // Predicated region
    $region2: #{rnn_feature_agent_forward.1} parent=1 // pred_check
      _
    $region3: #{rnn_feature_agent_forward.1} parent=1 // pred_check_branch
      %18 = sbr.rel (0) target = $region5
    $region4: #{rnn_feature_agent_forward.1} parent=1 // pred_region
      _
    $region5: #{rnn_feature_agent_forward.1} parent=1 // pred_fallthru
      _
    // Predicated region
    $region6: #{rnn_feature_agent_forward.1} parent=1 // pred_check
      _
    $region7: #{rnn_feature_agent_forward.1} parent=1 // pred_check_branch
      %20 = sbr.rel (0) target = $region9
    $region8: #{rnn_feature_agent_forward.1} parent=1 // pred_region
      _
    $region9: #{rnn_feature_agent_forward.1} parent=1 // pred_fallthru
      _
    // Predicated region
    $region10: #{rnn_feature_agent_forward.1} parent=1 // pred_check
      _
    $region11: #{rnn_feature_agent_forward.1} parent=1 // pred_check_branch
      %22 = sbr.rel (0) target = $region13
    $region12: #{rnn_feature_agent_forward.1} parent=1 // pred_region
      _
    $region13: #{rnn_feature_agent_forward.1} parent=1 // pred_fallthru
      _
    // Predicated region
    $region14: #{rnn_feature_agent_forward.1} parent=1 // pred_check
      _
    $region15: #{rnn_feature_agent_forward.1} parent=1 // pred_check_branch
      %24 = sbr.rel (0) target = $region17
    $region16: #{rnn_feature_agent_forward.1} parent=1 // pred_region
      _
    $region17: #{rnn_feature_agent_forward.1} parent=1 // pred_fallthru
      _
    // Predicated region
    $region18: #{rnn_feature_agent_forward.1} parent=1 // pred_check
      _
    $region19: #{rnn_feature_agent_forward.1} parent=1 // pred_check_branch
      %26 = sbr.rel (0) target = $region21
    $region20: #{rnn_feature_agent_forward.1} parent=1 // pred_region
      %s28 = ssub.s32 4096, 4096
      %29 = vsyncadd [#allocation3], %s28
      %s30 = sshll.u32 [#allocation2], 4
      %s31 = int_to_ptr.vmem [resolvable:$true] %s30
      %36 = dma.hbm_to_vmem [thread:$0]  %s4, 4096, %s31, [#allocation3], 128, 128, 8
    $region21: #{rnn_feature_agent_forward.1} parent=1 // pred_fallthru
      _
    // Predicated region
    $region22: #{rnn_feature_agent_forward.1} parent=1 // pred_check
      _
    $region23: #{rnn_feature_agent_forward.1} parent=1 // pred_check_branch
      %38 = sbr.rel (0) target = $region25
    $region24: #{rnn_feature_agent_forward.1} parent=1 // pred_region
      %s40 = ssub.s32 1024, 1024
      %41 = vsyncadd [#allocation5], %s40
      %s42 = sshll.u32 [#allocation4], 4
      %s43 = int_to_ptr.vmem [resolvable:$true] %s42
      %48 = dma.hbm_to_vmem [thread:$0]  %s5, 1024, %s43, [#allocation5], 64, 64, 4
    $region25: #{rnn_feature_agent_forward.1} parent=1 // pred_fallthru
      _
    // Predicated region
    $region26: #{rnn_feature_agent_forward.1} parent=1 // pred_check
      _
    $region27: #{rnn_feature_agent_forward.1} parent=1 // pred_check_branch
      %50 = sbr.rel (0) target = $region29
    $region28: #{rnn_feature_agent_forward.1} parent=1 // pred_region
      %s52 = ssub.s32 1024, 1024
      %53 = vsyncadd [#allocation5], %s52
      %s54 = sshll.u32 [#allocation6], 4
      %s55 = int_to_ptr.vmem [resolvable:$true] %s54
      %60 = dma.hbm_to_vmem [thread:$0]  %s6, 1024, %s55, [#allocation5], 64, 64, 4
    $region29: #{rnn_feature_agent_forward.1} parent=1 // pred_fallthru
      _
    // Predicated region
    $region30: #{rnn_feature_agent_forward.1} parent=1 // pred_check
      _
    $region31: #{rnn_feature_agent_forward.1} parent=1 // pred_check_branch
      %62 = sbr.rel (0) target = $region33
    $region32: #{rnn_feature_agent_forward.1} parent=1 // pred_region
      _
    $region33: #{rnn_feature_agent_forward.1} parent=1 // pred_fallthru
      _
    // Predicated region
    $region34: #{rnn_feature_agent_forward.1} parent=1 // pred_check
      _
    $region35: #{rnn_feature_agent_forward.1} parent=1 // pred_check_branch
      %64 = sbr.rel (0) target = $region37
    $region36: #{rnn_feature_agent_forward.1} parent=1 // pred_region
      _
    $region37: #{rnn_feature_agent_forward.1} parent=1 // pred_fallthru
      _
    // Predicated region
    $region38: #{rnn_feature_agent_forward.1} parent=1 // pred_check
      _
    $region39: #{rnn_feature_agent_forward.1} parent=1 // pred_check_branch
      %66 = sbr.rel (0) target = $region41
    $region40: #{rnn_feature_agent_forward.1} parent=1 // pred_region
      _
    $region41: #{rnn_feature_agent_forward.1} parent=1 // pred_fallthru
      _
    // Predicated region
    $region42: #{rnn_feature_agent_forward.1} parent=1 // pred_check
      _
    $region43: #{rnn_feature_agent_forward.1} parent=1 // pred_check_branch
      %68 = sbr.rel (0) target = $region45
    $region44: #{rnn_feature_agent_forward.1} parent=1 // pred_region
      %69 = dma.done [#allocation3], 4096
    $region45: #{rnn_feature_agent_forward.1} parent=1 // pred_fallthru
      _
    // Predicated region
    $region46: #{rnn_feature_agent_forward.1} parent=1 // pred_check
      _
    $region47: #{rnn_feature_agent_forward.1} parent=1 // pred_check_branch
      %71 = sbr.rel (0) target = $region49
    $region48: #{rnn_feature_agent_forward.1} parent=1 // pred_region
      %72 = dma.done [#allocation5], 1024
    $region49: #{rnn_feature_agent_forward.1} parent=1 // pred_fallthru
      _
    // Predicated region
    $region50: #{rnn_feature_agent_forward.1} parent=1 // pred_check
      _
    $region51: #{rnn_feature_agent_forward.1} parent=1 // pred_check_branch
      %74 = sbr.rel (0) target = $region53
    $region52: #{rnn_feature_agent_forward.1} parent=1 // pred_region
      %75 = dma.done [#allocation5], 1024
    $region53: #{rnn_feature_agent_forward.1} parent=1 // pred_fallthru
      _
    %v77 = vld [vmem:[%s0] sm:$0xf]
    %v78 = vld [vmem:[%s0 + $0x4] sm:$0xf]
    %v79 = vld [vmem:[%s1] sm:$0xf]
    %v80 = vld [vmem:[%s1 + $0x4] sm:$0xf]
    %v81 = vunpack.c.l.bf16 %v79
    %v82 = vunpack.c.l.bf16 %v80
    %v83 = vld [vmem:[%s2] sm:$0xf]
    %v84 = vld [vmem:[%s2 + $0x4] sm:$0xf]
    %v85 = vld [vmem:[%s2 + $0x8] sm:$0xf]
    %v86 = vld [vmem:[%s2 + $0xc] sm:$0xf]
    %v87 = vld [vmem:[%s2 + $0x10] sm:$0xf]
    %v88 = vld [vmem:[%s2 + $0x14] sm:$0xf]
    %v89 = vld [vmem:[%s2 + $0x18] sm:$0xf]
    %v90 = vld [vmem:[%s2 + $0x1c] sm:$0xf]
    %v91 = vld [vmem:[%s3] sm:$0x1]
    %v93 = vlaneseq
    %v94 = vshrl.u32 %v93, 7
    %v95 = vsub.s32 0, %v94
    %v96 = vrot.slane %v91, %v95
    %v100 = vunpack.c.l.b16 %v77
    %v101 = vunpack.c.l.b16 %v78
    %v102 = vpack.c.b16 %v101, %v100
    %v111 = vunpack.c.l.b16 %v83
    %v112 = vunpack.c.l.b16 %v84
    %v113 = vunpack.c.l.b16 %v85
    %v114 = vunpack.c.l.b16 %v86
    %v115 = vunpack.c.l.b16 %v87
    %v116 = vunpack.c.l.b16 %v88
    %v117 = vunpack.c.l.b16 %v89
    %v118 = vunpack.c.l.b16 %v90
    %v119 = vpack.c.b16 %v112, %v111
    %v120 = vpack.c.b16 %v114, %v113
    %v121 = vpack.c.b16 %v116, %v115
    %v122 = vpack.c.b16 %v118, %v117
    %vm127 = vcmask 523264
    %v129 = vsel %vm127, %v102, 0
    %131 = vmatprep.subr.bf16.mxu0 0
    %132 = vmatpush1.bf16.msra.mxu0 0
    %133 = vmatprep.subr.bf16.mxu0 0
    %134 = vmatpush1.bf16.msra.mxu0 0
    %135 = vmatprep.subr.bf16.mxu0 0
    %136 = vmatpush1.bf16.msra.mxu0 0
    %137 = vmatprep.subr.bf16.mxu0 0
    %138 = vmatpush1.bf16.msra.mxu0 0
    %139 = vmatprep.subr.bf16.mxu0 0
    %140 = vmatpush1.bf16.msra.mxu0 %v122
    %141 = vmatprep.subr.bf16.mxu0 0
    %142 = vmatpush1.bf16.msra.mxu0 %v121
    %143 = vmatprep.subr.bf16.mxu0 0
    %144 = vmatpush1.bf16.msra.mxu0 %v120
    %145 = vmatprep.subr.bf16.mxu0 0
    %146 = vmatpush1.bf16.msra.mxu0 %v119
    %147 = vmatprep.subr.bf16.mxu0 0
    %148 = vmatpush2.bf16.msra.mxu0 0
    %149 = vmatprep.subr.bf16.mxu0 0
    %150 = vmatpush2.bf16.msra.mxu0 0
    %151 = vmatprep.subr.bf16.mxu0 0
    %152 = vmatpush2.bf16.msra.mxu0 0
    %153 = vmatprep.subr.bf16.mxu0 0
    %154 = vmatpush2.bf16.msra.mxu0 0
    %155 = vmatprep.subr.bf16.mxu0 0
    %156 = vmatpush2.bf16.msra.mxu0 0
    %157 = vmatprep.subr.bf16.mxu0 0
    %158 = vmatpush2.bf16.msra.mxu0 0
    %159 = vmatprep.subr.bf16.mxu0 0
    %160 = vmatpush2.bf16.msra.mxu0 0
    %161 = vmatprep.subr.bf16.mxu0 0
    %162 = vmatpush2.bf16.msra.mxu0 0
    %163 = vmatprep.mubr.bf16.mxu0 0
    %164 = vmatmul.mubr.bf16.gmra.mxu0 %v129
    %v165 = vpop.f32.mrf.mxu0
    %v166 = vadd.f32 %v96, %v165
    %v167 = vpop.f32.mrf.mxu0
    %v168 = vpop.f32.mrf.mxu0
    %v169 = vadd.f32 %v96, %v168
    %v170 = vpop.f32.mrf.mxu0
    %171 = vdwg.mxu0
    %v172 = vmax.f32 %v166, 0.0
    %v173 = vmax.f32 %v169, 0.0
    %v174 = vpack.c.bf16 %v173, %v172
    %v177 = vunpack.c.l.b16 %v79
    %v178 = vunpack.c.l.b16 %v80
    %v179 = vpack.c.b16 %v178, %v177
    %v181 = vld [vmem:[#allocation2] sm:$0xff]
    %v182 = vld [vmem:[#allocation2 + $0x8] sm:$0xff]
    %v183 = vld [vmem:[#allocation2 + $0x10] sm:$0xff]
    %v184 = vld [vmem:[#allocation2 + $0x18] sm:$0xff]
    %v185 = vld [vmem:[#allocation2 + $0x20] sm:$0xff]
    %v186 = vld [vmem:[#allocation2 + $0x28] sm:$0xff]
    %v187 = vld [vmem:[#allocation2 + $0x30] sm:$0xff]
    %v188 = vld [vmem:[#allocation2 + $0x38] sm:$0xff]
    %v189 = vld [vmem:[#allocation2 + $0x40] sm:$0xff]
    %v190 = vld [vmem:[#allocation2 + $0x48] sm:$0xff]
    %v191 = vld [vmem:[#allocation2 + $0x50] sm:$0xff]
    %v192 = vld [vmem:[#allocation2 + $0x58] sm:$0xff]
    %v193 = vld [vmem:[#allocation2 + $0x60] sm:$0xff]
    %v194 = vld [vmem:[#allocation2 + $0x68] sm:$0xff]
    %v195 = vld [vmem:[#allocation2 + $0x70] sm:$0xff]
    %v196 = vld [vmem:[#allocation2 + $0x78] sm:$0xff]
    %v197 = vld [vmem:[#allocation2 + $0x80] sm:$0xff]
    %v198 = vld [vmem:[#allocation2 + $0x88] sm:$0xff]
    %v199 = vld [vmem:[#allocation2 + $0x90] sm:$0xff]
    %v200 = vld [vmem:[#allocation2 + $0x98] sm:$0xff]
    %v201 = vld [vmem:[#allocation2 + $0xa0] sm:$0xff]
    %v202 = vld [vmem:[#allocation2 + $0xa8] sm:$0xff]
    %v203 = vld [vmem:[#allocation2 + $0xb0] sm:$0xff]
    %v204 = vld [vmem:[#allocation2 + $0xb8] sm:$0xff]
    %v205 = vld [vmem:[#allocation2 + $0xc0] sm:$0xff]
    %v206 = vld [vmem:[#allocation2 + $0xc8] sm:$0xff]
    %v207 = vld [vmem:[#allocation2 + $0xd0] sm:$0xff]
    %v208 = vld [vmem:[#allocation2 + $0xd8] sm:$0xff]
    %v209 = vld [vmem:[#allocation2 + $0xe0] sm:$0xff]
    %v210 = vld [vmem:[#allocation2 + $0xe8] sm:$0xff]
    %v211 = vld [vmem:[#allocation2 + $0xf0] sm:$0xff]
    %v212 = vld [vmem:[#allocation2 + $0xf8] sm:$0xff]
    %v213 = vld [vmem:[%s7] sm:$0x3]
    %v215 = vlaneseq
    %v216 = vshrl.u32 %v215, 7
    %v217 = vsub.s32 0, %v216
    %v218 = vrot.slane %v213, %v217
    %v219 = vlaneseq
    %v220 = vshrl.u32 %v219, 7
    %v221 = vsub.s32 1, %v220
    %v222 = vrot.slane %v213, %v221
    %v257 = vunpack.c.l.b16 %v181
    %v258 = vunpack.c.h.b16 %v181
    %v259 = vunpack.c.l.b16 %v182
    %v260 = vunpack.c.h.b16 %v182
    %v261 = vunpack.c.l.b16 %v183
    %v262 = vunpack.c.h.b16 %v183
    %v263 = vunpack.c.l.b16 %v184
    %v264 = vunpack.c.h.b16 %v184
    %v265 = vunpack.c.l.b16 %v185
    %v266 = vunpack.c.h.b16 %v185
    %v267 = vunpack.c.l.b16 %v186
    %v268 = vunpack.c.h.b16 %v186
    %v269 = vunpack.c.l.b16 %v187
    %v270 = vunpack.c.h.b16 %v187
    %v271 = vunpack.c.l.b16 %v188
    %v272 = vunpack.c.h.b16 %v188
    %v273 = vunpack.c.l.b16 %v189
    %v274 = vunpack.c.h.b16 %v189
    %v275 = vunpack.c.l.b16 %v190
    %v276 = vunpack.c.h.b16 %v190
    %v277 = vunpack.c.l.b16 %v191
    %v278 = vunpack.c.h.b16 %v191
    %v279 = vunpack.c.l.b16 %v192
    %v280 = vunpack.c.h.b16 %v192
    %v281 = vunpack.c.l.b16 %v193
    %v282 = vunpack.c.h.b16 %v193
    %v283 = vunpack.c.l.b16 %v194
    %v284 = vunpack.c.h.b16 %v194
    %v285 = vunpack.c.l.b16 %v195
    %v286 = vunpack.c.h.b16 %v195
    %v287 = vunpack.c.l.b16 %v196
    %v288 = vunpack.c.h.b16 %v196
    %v289 = vunpack.c.l.b16 %v197
    %v290 = vunpack.c.h.b16 %v197
    %v291 = vunpack.c.l.b16 %v198
    %v292 = vunpack.c.h.b16 %v198
    %v293 = vunpack.c.l.b16 %v199
    %v294 = vunpack.c.h.b16 %v199
    %v295 = vunpack.c.l.b16 %v200
    %v296 = vunpack.c.h.b16 %v200
    %v297 = vunpack.c.l.b16 %v201
    %v298 = vunpack.c.h.b16 %v201
    %v299 = vunpack.c.l.b16 %v202
    %v300 = vunpack.c.h.b16 %v202
    %v301 = vunpack.c.l.b16 %v203
    %v302 = vunpack.c.h.b16 %v203
    %v303 = vunpack.c.l.b16 %v204
    %v304 = vunpack.c.h.b16 %v204
    %v305 = vunpack.c.l.b16 %v205
    %v306 = vunpack.c.h.b16 %v205
    %v307 = vunpack.c.l.b16 %v206
    %v308 = vunpack.c.h.b16 %v206
    %v309 = vunpack.c.l.b16 %v207
    %v310 = vunpack.c.h.b16 %v207
    %v311 = vunpack.c.l.b16 %v208
    %v312 = vunpack.c.h.b16 %v208
    %v313 = vunpack.c.l.b16 %v209
    %v314 = vunpack.c.h.b16 %v209
    %v315 = vunpack.c.l.b16 %v210
    %v316 = vunpack.c.h.b16 %v210
    %v317 = vunpack.c.l.b16 %v211
    %v318 = vunpack.c.h.b16 %v211
    %v319 = vunpack.c.l.b16 %v212
    %v320 = vunpack.c.h.b16 %v212
    %v321 = vpack.c.b16 %v259, %v257
    %v322 = vpack.c.b16 %v260, %v258
    %v323 = vpack.c.b16 %v263, %v261
    %v324 = vpack.c.b16 %v264, %v262
    %v325 = vpack.c.b16 %v267, %v265
    %v326 = vpack.c.b16 %v268, %v266
    %v327 = vpack.c.b16 %v271, %v269
    %v328 = vpack.c.b16 %v272, %v270
    %v329 = vpack.c.b16 %v275, %v273
    %v330 = vpack.c.b16 %v276, %v274
    %v331 = vpack.c.b16 %v279, %v277
    %v332 = vpack.c.b16 %v280, %v278
    %v333 = vpack.c.b16 %v283, %v281
    %v334 = vpack.c.b16 %v284, %v282
    %v335 = vpack.c.b16 %v287, %v285
    %v336 = vpack.c.b16 %v288, %v286
    %v337 = vpack.c.b16 %v291, %v289
    %v338 = vpack.c.b16 %v292, %v290
    %v339 = vpack.c.b16 %v295, %v293
    %v340 = vpack.c.b16 %v296, %v294
    %v341 = vpack.c.b16 %v299, %v297
    %v342 = vpack.c.b16 %v300, %v298
    %v343 = vpack.c.b16 %v303, %v301
    %v344 = vpack.c.b16 %v304, %v302
    %v345 = vpack.c.b16 %v307, %v305
    %v346 = vpack.c.b16 %v308, %v306
    %v347 = vpack.c.b16 %v311, %v309
    %v348 = vpack.c.b16 %v312, %v310
    %v349 = vpack.c.b16 %v315, %v313
    %v350 = vpack.c.b16 %v316, %v314
    %v351 = vpack.c.b16 %v319, %v317
    %v352 = vpack.c.b16 %v320, %v318
    %385 = vmatprep.subr.bf16.mxu0 %v336
    %386 = vmatpush1.bf16.msra.mxu0 %v335
    %387 = vmatprep.subr.bf16.mxu0 %v334
    %388 = vmatpush1.bf16.msra.mxu0 %v333
    %389 = vmatprep.subr.bf16.mxu0 %v332
    %390 = vmatpush1.bf16.msra.mxu0 %v331
    %391 = vmatprep.subr.bf16.mxu0 %v330
    %392 = vmatpush1.bf16.msra.mxu0 %v329
    %393 = vmatprep.subr.bf16.mxu0 %v328
    %394 = vmatpush1.bf16.msra.mxu0 %v327
    %395 = vmatprep.subr.bf16.mxu0 %v326
    %396 = vmatpush1.bf16.msra.mxu0 %v325
    %397 = vmatprep.subr.bf16.mxu0 %v324
    %398 = vmatpush1.bf16.msra.mxu0 %v323
    %399 = vmatprep.subr.bf16.mxu0 %v322
    %400 = vmatpush1.bf16.msra.mxu0 %v321
    %401 = vmatprep.subr.bf16.mxu0 %v352
    %402 = vmatpush2.bf16.msra.mxu0 %v351
    %403 = vmatprep.subr.bf16.mxu0 %v350
    %404 = vmatpush2.bf16.msra.mxu0 %v349
    %405 = vmatprep.subr.bf16.mxu0 %v348
    %406 = vmatpush2.bf16.msra.mxu0 %v347
    %407 = vmatprep.subr.bf16.mxu0 %v346
    %408 = vmatpush2.bf16.msra.mxu0 %v345
    %409 = vmatprep.subr.bf16.mxu0 %v344
    %410 = vmatpush2.bf16.msra.mxu0 %v343
    %411 = vmatprep.subr.bf16.mxu0 %v342
    %412 = vmatpush2.bf16.msra.mxu0 %v341
    %413 = vmatprep.subr.bf16.mxu0 %v340
    %414 = vmatpush2.bf16.msra.mxu0 %v339
    %415 = vmatprep.subr.bf16.mxu0 %v338
    %416 = vmatpush2.bf16.msra.mxu0 %v337
    %417 = vmatprep.mubr.bf16.mxu0 %v179
    %418 = vmatmul.mubr.bf16.gmra.mxu0 %v174
    %v419 = vpop.f32.mrf.mxu0
    %v420 = vadd.f32 %v218, %v419
    %v421 = vpop.f32.mrf.mxu0
    %v422 = vadd.f32 %v222, %v421
    %v423 = vpop.f32.mrf.mxu0
    %v424 = vadd.f32 %v218, %v423
    %v425 = vpop.f32.mrf.mxu0
    %v426 = vadd.f32 %v222, %v425
    %427 = vdwg.mxu0
    %v428 = vxor.u32 %v420, 2147483648
    %v429 = vxor.u32 %v422, 2147483648
    %v430 = vxor.u32 %v424, 2147483648
    %v431 = vxor.u32 %v426, 2147483648
    %v432 = vmul.f32 %v428, 1.442695
    %v433 = vpow.pop %v432
    %v434 = vmul.f32 %v429, 1.442695
    %v435 = vpow.pop %v434
    %v436 = vmul.f32 %v430, 1.442695
    %v437 = vpow.pop %v436
    %v438 = vmul.f32 %v431, 1.442695
    %v439 = vpow.pop %v438
    %v440 = vadd.f32 %v433, 1.0
    %v441 = vadd.f32 %v435, 1.0
    %v442 = vadd.f32 %v437, 1.0
    %v443 = vadd.f32 %v439, 1.0
    %v444 = vrcp.pop %v440
    %v445 = vmul.f32 1.0, %v444
    %v446 = vrcp.pop %v441
    %v447 = vmul.f32 1.0, %v446
    %v448 = vrcp.pop %v442
    %v449 = vmul.f32 1.0, %v448
    %v450 = vrcp.pop %v443
    %v451 = vmul.f32 1.0, %v450
    %v452 = vld [vmem:[#allocation4] sm:$0xf]
    %v453 = vld [vmem:[#allocation4 + $0x4] sm:$0xf]
    %v454 = vld [vmem:[#allocation4 + $0x8] sm:$0xf]
    %v455 = vld [vmem:[#allocation4 + $0xc] sm:$0xf]
    %v456 = vld [vmem:[#allocation4 + $0x10] sm:$0xf]
    %v457 = vld [vmem:[#allocation4 + $0x14] sm:$0xf]
    %v458 = vld [vmem:[#allocation4 + $0x18] sm:$0xf]
    %v459 = vld [vmem:[#allocation4 + $0x1c] sm:$0xf]
    %v460 = vld [vmem:[#allocation4 + $0x20] sm:$0xf]
    %v461 = vld [vmem:[#allocation4 + $0x24] sm:$0xf]
    %v462 = vld [vmem:[#allocation4 + $0x28] sm:$0xf]
    %v463 = vld [vmem:[#allocation4 + $0x2c] sm:$0xf]
    %v464 = vld [vmem:[#allocation4 + $0x30] sm:$0xf]
    %v465 = vld [vmem:[#allocation4 + $0x34] sm:$0xf]
    %v466 = vld [vmem:[#allocation4 + $0x38] sm:$0xf]
    %v467 = vld [vmem:[#allocation4 + $0x3c] sm:$0xf]
    %v468 = vld [vmem:[%s8] sm:$0x1]
    %v470 = vlaneseq
    %v471 = vshrl.u32 %v470, 7
    %v472 = vsub.s32 0, %v471
    %v473 = vrot.slane %v468, %v472
    %v491 = vunpack.c.l.b16 %v452
    %v492 = vunpack.c.l.b16 %v453
    %v493 = vunpack.c.l.b16 %v454
    %v494 = vunpack.c.l.b16 %v455
    %v495 = vunpack.c.l.b16 %v456
    %v496 = vunpack.c.l.b16 %v457
    %v497 = vunpack.c.l.b16 %v458
    %v498 = vunpack.c.l.b16 %v459
    %v499 = vunpack.c.l.b16 %v460
    %v500 = vunpack.c.l.b16 %v461
    %v501 = vunpack.c.l.b16 %v462
    %v502 = vunpack.c.l.b16 %v463
    %v503 = vunpack.c.l.b16 %v464
    %v504 = vunpack.c.l.b16 %v465
    %v505 = vunpack.c.l.b16 %v466
    %v506 = vunpack.c.l.b16 %v467
    %v507 = vpack.c.b16 %v492, %v491
    %v508 = vpack.c.b16 %v494, %v493
    %v509 = vpack.c.b16 %v496, %v495
    %v510 = vpack.c.b16 %v498, %v497
    %v511 = vpack.c.b16 %v500, %v499
    %v512 = vpack.c.b16 %v502, %v501
    %v513 = vpack.c.b16 %v504, %v503
    %v514 = vpack.c.b16 %v506, %v505
    %523 = vmatprep.subr.bf16.mxu0 0
    %524 = vmatpush1.bf16.msra.mxu0 %v514
    %525 = vmatprep.subr.bf16.mxu0 0
    %526 = vmatpush1.bf16.msra.mxu0 %v513
    %527 = vmatprep.subr.bf16.mxu0 0
    %528 = vmatpush1.bf16.msra.mxu0 %v512
    %529 = vmatprep.subr.bf16.mxu0 0
    %530 = vmatpush1.bf16.msra.mxu0 %v511
    %531 = vmatprep.subr.bf16.mxu0 0
    %532 = vmatpush1.bf16.msra.mxu0 %v510
    %533 = vmatprep.subr.bf16.mxu0 0
    %534 = vmatpush1.bf16.msra.mxu0 %v509
    %535 = vmatprep.subr.bf16.mxu0 0
    %536 = vmatpush1.bf16.msra.mxu0 %v508
    %537 = vmatprep.subr.bf16.mxu0 0
    %538 = vmatpush1.bf16.msra.mxu0 %v507
    %539 = vmatprep.subr.bf16.mxu0 0
    %540 = vmatpush2.bf16.msra.mxu0 0
    %541 = vmatprep.subr.bf16.mxu0 0
    %542 = vmatpush2.bf16.msra.mxu0 0
    %543 = vmatprep.subr.bf16.mxu0 0
    %544 = vmatpush2.bf16.msra.mxu0 0
    %545 = vmatprep.subr.bf16.mxu0 0
    %546 = vmatpush2.bf16.msra.mxu0 0
    %547 = vmatprep.subr.bf16.mxu0 0
    %548 = vmatpush2.bf16.msra.mxu0 0
    %549 = vmatprep.subr.bf16.mxu0 0
    %550 = vmatpush2.bf16.msra.mxu0 0
    %551 = vmatprep.subr.bf16.mxu0 0
    %552 = vmatpush2.bf16.msra.mxu0 0
    %553 = vmatprep.subr.bf16.mxu0 0
    %554 = vmatpush2.bf16.msra.mxu0 0
    %555 = vmatprep.mubr.bf16.mxu0 0
    %556 = vmatmul.mubr.bf16.gmra.mxu0 %v174
    %v557 = vpop.f32.mrf.mxu0
    %v558 = vadd.f32 %v473, %v557
    %v559 = vpop.f32.mrf.mxu0
    %v560 = vpop.f32.mrf.mxu0
    %v561 = vadd.f32 %v473, %v560
    %v562 = vpop.f32.mrf.mxu0
    %563 = vdwg.mxu0
    %v564 = vld [vmem:[#allocation6] sm:$0xf]
    %v565 = vld [vmem:[#allocation6 + $0x4] sm:$0xf]
    %v566 = vld [vmem:[#allocation6 + $0x8] sm:$0xf]
    %v567 = vld [vmem:[#allocation6 + $0xc] sm:$0xf]
    %v568 = vld [vmem:[#allocation6 + $0x10] sm:$0xf]
    %v569 = vld [vmem:[#allocation6 + $0x14] sm:$0xf]
    %v570 = vld [vmem:[#allocation6 + $0x18] sm:$0xf]
    %v571 = vld [vmem:[#allocation6 + $0x1c] sm:$0xf]
    %v572 = vld [vmem:[#allocation6 + $0x20] sm:$0xf]
    %v573 = vld [vmem:[#allocation6 + $0x24] sm:$0xf]
    %v574 = vld [vmem:[#allocation6 + $0x28] sm:$0xf]
    %v575 = vld [vmem:[#allocation6 + $0x2c] sm:$0xf]
    %v576 = vld [vmem:[#allocation6 + $0x30] sm:$0xf]
    %v577 = vld [vmem:[#allocation6 + $0x34] sm:$0xf]
    %v578 = vld [vmem:[#allocation6 + $0x38] sm:$0xf]
    %v579 = vld [vmem:[#allocation6 + $0x3c] sm:$0xf]
    %v580 = vld [vmem:[%s9] sm:$0x1]
    %v582 = vlaneseq
    %v583 = vshrl.u32 %v582, 7
    %v584 = vsub.s32 0, %v583
    %v585 = vrot.slane %v580, %v584
    %v603 = vunpack.c.l.b16 %v564
    %v604 = vunpack.c.l.b16 %v565
    %v605 = vunpack.c.l.b16 %v566
    %v606 = vunpack.c.l.b16 %v567
    %v607 = vunpack.c.l.b16 %v568
    %v608 = vunpack.c.l.b16 %v569
    %v609 = vunpack.c.l.b16 %v570
    %v610 = vunpack.c.l.b16 %v571
    %v611 = vunpack.c.l.b16 %v572
    %v612 = vunpack.c.l.b16 %v573
    %v613 = vunpack.c.l.b16 %v574
    %v614 = vunpack.c.l.b16 %v575
    %v615 = vunpack.c.l.b16 %v576
    %v616 = vunpack.c.l.b16 %v577
    %v617 = vunpack.c.l.b16 %v578
    %v618 = vunpack.c.l.b16 %v579
    %v619 = vpack.c.b16 %v604, %v603
    %v620 = vpack.c.b16 %v606, %v605
    %v621 = vpack.c.b16 %v608, %v607
    %v622 = vpack.c.b16 %v610, %v609
    %v623 = vpack.c.b16 %v612, %v611
    %v624 = vpack.c.b16 %v614, %v613
    %v625 = vpack.c.b16 %v616, %v615
    %v626 = vpack.c.b16 %v618, %v617
    %635 = vmatprep.subr.bf16.mxu0 0
    %636 = vmatpush1.bf16.msra.mxu0 %v626
    %637 = vmatprep.subr.bf16.mxu0 0
    %638 = vmatpush1.bf16.msra.mxu0 %v625
    %639 = vmatprep.subr.bf16.mxu0 0
    %640 = vmatpush1.bf16.msra.mxu0 %v624
    %641 = vmatprep.subr.bf16.mxu0 0
    %642 = vmatpush1.bf16.msra.mxu0 %v623
    %643 = vmatprep.subr.bf16.mxu0 0
    %644 = vmatpush1.bf16.msra.mxu0 %v622
    %645 = vmatprep.subr.bf16.mxu0 0
    %646 = vmatpush1.bf16.msra.mxu0 %v621
    %647 = vmatprep.subr.bf16.mxu0 0
    %648 = vmatpush1.bf16.msra.mxu0 %v620
    %649 = vmatprep.subr.bf16.mxu0 0
    %650 = vmatpush1.bf16.msra.mxu0 %v619
    %651 = vmatprep.subr.bf16.mxu0 0
    %652 = vmatpush2.bf16.msra.mxu0 0
    %653 = vmatprep.subr.bf16.mxu0 0
    %654 = vmatpush2.bf16.msra.mxu0 0
    %655 = vmatprep.subr.bf16.mxu0 0
    %656 = vmatpush2.bf16.msra.mxu0 0
    %657 = vmatprep.subr.bf16.mxu0 0
    %658 = vmatpush2.bf16.msra.mxu0 0
    %659 = vmatprep.subr.bf16.mxu0 0
    %660 = vmatpush2.bf16.msra.mxu0 0
    %661 = vmatprep.subr.bf16.mxu0 0
    %662 = vmatpush2.bf16.msra.mxu0 0
    %663 = vmatprep.subr.bf16.mxu0 0
    %664 = vmatpush2.bf16.msra.mxu0 0
    %665 = vmatprep.subr.bf16.mxu0 0
    %666 = vmatpush2.bf16.msra.mxu0 0
    %667 = vmatprep.mubr.bf16.mxu0 0
    %668 = vmatmul.mubr.bf16.gmra.mxu0 %v179
    %v669 = vpop.f32.mrf.mxu0
    %v670 = vadd.f32 %v585, %v669
    %v671 = vpop.f32.mrf.mxu0
    %v672 = vpop.f32.mrf.mxu0
    %v673 = vadd.f32 %v585, %v672
    %v674 = vpop.f32.mrf.mxu0
    %675 = vdwg.mxu0
    %v676 = vmul.f32 %v445, %v670
    %v677 = vmul.f32 %v449, %v673
    %v678 = vadd.f32 %v558, %v676
    %v679 = vadd.f32 %v561, %v677
    %v680 = vtanh.pop %v678
    %v681 = vtanh.pop %v679
    %v682 = vsub.f32 1.0, %v447
    %v683 = vsub.f32 1.0, %v451
    %v684 = vmul.f32 %v682, %v680
    %v685 = vmul.f32 %v683, %v681
    %v686 = vmul.f32 %v447, %v81
    %v687 = vmul.f32 %v451, %v82
    %v688 = vadd.f32 %v684, %v686
    %v689 = vadd.f32 %v685, %v687
    %v690 = vpack.c.bf16 %v689, %v688
    %v692 = vunpack.c.l.b16 %v690
    %v693 = vunpack.c.h.b16 %v690
    %v694 = vpack.c.b16 %v692, %v692
    %v695 = vpack.c.b16 %v693, %v693
    %698 = vst [vmem:[%s10] sm:$0xf] %v694
    %699 = vst [vmem:[%s10 + $0x4] sm:$0xf] %v695
    // Predicated region
    $region54: #{rnn_feature_agent_forward.1} parent=1 // pred_check
      _
    $region55: #{rnn_feature_agent_forward.1} parent=1 // pred_check_branch
      %701 = sbr.rel (0) target = $region57
    $region56: #{rnn_feature_agent_forward.1} parent=1 // pred_region
      _
    $region57: #{rnn_feature_agent_forward.1} parent=1 // pred_fallthru
      _
    // Predicated region
    $region58: #{rnn_feature_agent_forward.1} parent=1 // pred_check
      _
    $region59: #{rnn_feature_agent_forward.1} parent=1 // pred_check_branch
      %703 = sbr.rel (0) target = $region61
    $region60: #{rnn_feature_agent_forward.1} parent=1 // pred_region
      _
    $region61: #{rnn_feature_agent_forward.1} parent=1 // pred_fallthru
      _
    %704 = vsyncpa [#allocation3], 1
    %705 = vsyncpa [#allocation5], 1

</llo_original>
